<compile_context>
chip_gen: v7x
topology: tpu7x:2x2x1
jax: 0.10.0
libtpu: 0.0.40
codegen_flags: <defaults>
</compile_context>

<pallas_src>
import functools

import jax
import jax.numpy as jnp
from jax.experimental import pallas as pl
from jax.experimental.pallas import tpu as pltpu

LANE = 128                     # padded feature width for every layer
N_LAYERS = 5
W_ROWS = N_LAYERS * LANE       # 640 rows of packed (128,128) weights
B_ROWS = N_LAYERS * 8          # each bias sits in row 0 of its own 8-row tile
SLAB_ROWS = W_ROWS + B_ROWS    # 680


def _sigmoid(z):
    # exp on the EUP + approximate reciprocal on the EUP vrcp slot (frees VALU).
    return pl.reciprocal(1.0 + jnp.exp(-z), approx=True)


def mlp_kernel(x_ref, p_ref, o_ref):
    """x_ref: (TB, 128) f32 batch tile; p_ref: (680, 128) f32 packed params;
    o_ref: (TB, 128) f32 (padded lanes hold sigmoid(0)=0.5, sliced outside)."""
    h = x_ref[...]
    for i in range(N_LAYERS):                       # unrolled at trace time
        w = p_ref[LANE * i:LANE * (i + 1), :]       # (128, 128), tile-aligned
        b = p_ref[W_ROWS + 8 * i:W_ROWS + 8 * i + 1, :]   # (1, 128)
        z = jnp.dot(h, w, preferred_element_type=jnp.float32) + b
        if i < N_LAYERS - 1:
            h = z * _sigmoid(z)                     # SiLU; padded lanes stay 0
        else:
            h = _sigmoid(z)                         # final sigmoid
    o_ref[...] = h.astype(o_ref.dtype)


def _round_up(n, m):
    return (n + m - 1) // m * m


def pack_params(params):
    """Pack [(w1,b1)..(w5,b5)] (weights pre-transposed to (in,out)) into one
    zero-padded lane-dense slab of shape (SLAB_ROWS, LANE). Padded weight
    columns / bias lanes are zero so SiLU(0)=0 keeps padded lanes inert."""
    slab = jnp.zeros((SLAB_ROWS, LANE), jnp.float32)
    for i, (w, b) in enumerate(params):
        fin, fout = w.shape
        slab = slab.at[LANE * i:LANE * i + fin, :fout].set(w.astype(jnp.float32))
        slab = slab.at[W_ROWS + 8 * i, :fout].set(b.astype(jnp.float32))
    return slab


def net_forward(x, params):
    """x: (B, D_in) f32; params = [(w, b)] * 5 with w already (in, out)."""
    B, d_in = x.shape
    d_out = params[-1][0].shape[1]
    assert d_in <= LANE and d_out <= LANE and all(w.shape[1] <= LANE for w, _ in params)

    # Batch tiling: sublane-aligned tile, capped at 128 rows; grid over tiles.
    b_pad = _round_up(B, 8)
    tb = min(128, b_pad)
    b_pad = _round_up(b_pad, tb)
    grid = (b_pad // tb,)

    x_pad = jnp.zeros((b_pad, LANE), jnp.float32).at[:B, :d_in].set(
        x.astype(jnp.float32))
    slab = pack_params(params)

    flops = 2 * b_pad * N_LAYERS * LANE * LANE
    transcendentals = 2 * N_LAYERS * b_pad * LANE          # exp + rcp per sigmoid
    bytes_accessed = 4 * (x_pad.size + slab.size + b_pad * LANE)

    out_pad = pl.pallas_call(
        mlp_kernel,
        out_shape=jax.ShapeDtypeStruct((b_pad, LANE), jnp.float32),
        grid_spec=pltpu.PrefetchScalarGridSpec(
            num_scalar_prefetch=0,
            grid=grid,
            in_specs=[
                pl.BlockSpec((tb, LANE), lambda i: (i, 0)),          # x tile
                pl.BlockSpec((SLAB_ROWS, LANE), lambda i: (0, 0)),   # resident params
            ],
            out_specs=pl.BlockSpec((tb, LANE), lambda i: (i, 0)),
        ),
        compiler_params=pltpu.CompilerParams(
            dimension_semantics=("parallel",)),
        cost_estimate=pl.CostEstimate(
            flops=flops,
            transcendentals=transcendentals,
            bytes_accessed=bytes_accessed),
    )(x_pad, slab)

    return out_pad[:B, :d_out]


def init_params(key, D_in, H1, H2, H3, H4, D_out):
    """linear1: kaiming_normal_ (fan_in, a=0); others: PyTorch default
    uniform(-1/sqrt(fan_in), 1/sqrt(fan_in)). Weights stored as (in, out)."""
    dims = [(D_in, H1), (H1, H2), (H2, H3), (H3, H4), (H4, D_out)]
    params = []
    keys = jax.random.split(key, 2 * len(dims))
    for i, (fan_in, fan_out) in enumerate(dims):
        kw, kb = keys[2 * i], keys[2 * i + 1]
        if i == 0:
            std = jnp.sqrt(2.0 / fan_in)
            w = std * jax.random.normal(kw, (fan_in, fan_out), dtype=jnp.float32)
        else:
            bound = 1.0 / jnp.sqrt(fan_in)
            w = jax.random.uniform(kw, (fan_in, fan_out), dtype=jnp.float32,
                                   minval=-bound, maxval=bound)
        bound_b = 1.0 / jnp.sqrt(fan_in)
        b = jax.random.uniform(kb, (fan_out,), dtype=jnp.float32,
                               minval=-bound_b, maxval=bound_b)
        params.append((w, b))
    return params


def reference_forward(x, params):
    """Pure-JAX reference (exact sigmoid) for a sanity check."""
    h = x
    for i, (w, b) in enumerate(params):
        z = h @ w + b
        h = jax.nn.sigmoid(z) if i == len(params) - 1 else z * jax.nn.sigmoid(z)
    return h


if __name__ == "__main__":
    # Small shapes consistent with the module: batch=8, D_in=32, hiddens, D_out=16.
    B, D_in, H1, H2, H3, H4, D_out = 8, 32, 64, 64, 48, 32, 16

    key = jax.random.PRNGKey(0)
    kx, kp = jax.random.split(key)
    x = jax.random.normal(kx, (B, D_in), dtype=jnp.float32)
    params = init_params(kp, D_in, H1, H2, H3, H4, D_out)

    out = net_forward(x, params)
    out = jax.block_until_ready(out)

    ref = reference_forward(x, params)
    assert out.shape == (B, D_out)
    # Tolerance accounts for the EUP approximate reciprocal in the in-kernel
    # sigmoid (set approx=False in _sigmoid for bit-tight f32 parity).
    assert jnp.allclose(out, ref, atol=2e-2, rtol=2e-2)

    print("KERNEL_OK")
</pallas_src>

<mosaic_0001>
module attributes {stable_mosaic.version = 11 : i64} {
  func.func @mlp_kernel(%arg0: i32, %arg1: memref<8x128xf32, #tpu.memory_space<vmem>>, %arg2: memref<680x128xf32, #tpu.memory_space<vmem>>, %arg3: memref<8x128xf32, #tpu.memory_space<vmem>>) attributes {dimension_semantics = [#tpu.dimension_semantics<parallel>], iteration_bounds = array<i64: 1>, scalar_prefetch = 0 : i64, scratch_operands = 0 : i64, tpu.core_type = #tpu.core_type<tc>, window_params = [{transform_indices = @transform_0, window_bounds = array<i64: 8, 128>}, {pipeline_mode = #tpu.pipeline_mode<synchronous>, transform_indices = @transform_1, window_bounds = array<i64: 680, 128>}, {transform_indices = @transform_2, window_bounds = array<i64: 8, 128>}]} {
    %c0 = arith.constant 0 : index
    %c0_0 = arith.constant 0 : index
    %0 = vector.load %arg1[%c0, %c0_0] : memref<8x128xf32, #tpu.memory_space<vmem>>, vector<8x128xf32>
    %c0_1 = arith.constant 0 : index
    %c0_2 = arith.constant 0 : index
    %1 = vector.load %arg2[%c0_1, %c0_2] : memref<680x128xf32, #tpu.memory_space<vmem>>, vector<128x128xf32>
    %c640 = arith.constant 640 : index
    %c0_3 = arith.constant 0 : index
    %2 = vector.load %arg2[%c640, %c0_3] : memref<680x128xf32, #tpu.memory_space<vmem>>, vector<1x128xf32>
    %cst = arith.constant dense<0.000000e+00> : vector<8x128xf32>
    %3 = tpu.matmul %0, %1, %cst {dimension_numbers = #tpu.dot_dimension_numbers<[1], [0], [0], [1], [0, 0, 1, 1], [], []>} : vector<8x128xf32>, vector<128x128xf32>, vector<8x128xf32> -> vector<8x128xf32>
    %4 = vector.broadcast %2 : vector<1x128xf32> to vector<8x128xf32>
    %5 = arith.addf %3, %4 : vector<8x128xf32>
    %cst_4 = arith.constant 0.000000e+00 : f32
    %6 = vector.broadcast %cst_4 : f32 to vector<8x128xf32>
    %7 = arith.subf %6, %5 : vector<8x128xf32>
    %8 = math.exp %7 : vector<8x128xf32>
    %cst_5 = arith.constant 1.000000e+00 : f32
    %9 = vector.broadcast %cst_5 : f32 to vector<8x128xf32>
    %10 = arith.addf %9, %8 : vector<8x128xf32>
    %11 = tpu.reciprocal %10 {approx = true} : vector<8x128xf32> -> vector<8x128xf32>
    %12 = arith.mulf %5, %11 : vector<8x128xf32>
    %c128 = arith.constant 128 : index
    %c0_6 = arith.constant 0 : index
    %13 = vector.load %arg2[%c128, %c0_6] : memref<680x128xf32, #tpu.memory_space<vmem>>, vector<128x128xf32>
    %c648 = arith.constant 648 : index
    %c0_7 = arith.constant 0 : index
    %14 = vector.load %arg2[%c648, %c0_7] : memref<680x128xf32, #tpu.memory_space<vmem>>, vector<1x128xf32>
    %cst_8 = arith.constant dense<0.000000e+00> : vector<8x128xf32>
    %15 = tpu.matmul %12, %13, %cst_8 {dimension_numbers = #tpu.dot_dimension_numbers<[1], [0], [0], [1], [0, 0, 1, 1], [], []>} : vector<8x128xf32>, vector<128x128xf32>, vector<8x128xf32> -> vector<8x128xf32>
    %16 = vector.broadcast %14 : vector<1x128xf32> to vector<8x128xf32>
    %17 = arith.addf %15, %16 : vector<8x128xf32>
    %cst_9 = arith.constant 0.000000e+00 : f32
    %18 = vector.broadcast %cst_9 : f32 to vector<8x128xf32>
    %19 = arith.subf %18, %17 : vector<8x128xf32>
    %20 = math.exp %19 : vector<8x128xf32>
    %cst_10 = arith.constant 1.000000e+00 : f32
    %21 = vector.broadcast %cst_10 : f32 to vector<8x128xf32>
    %22 = arith.addf %21, %20 : vector<8x128xf32>
    %23 = tpu.reciprocal %22 {approx = true} : vector<8x128xf32> -> vector<8x128xf32>
    %24 = arith.mulf %17, %23 : vector<8x128xf32>
    %c256 = arith.constant 256 : index
    %c0_11 = arith.constant 0 : index
    %25 = vector.load %arg2[%c256, %c0_11] : memref<680x128xf32, #tpu.memory_space<vmem>>, vector<128x128xf32>
    %c656 = arith.constant 656 : index
    %c0_12 = arith.constant 0 : index
    %26 = vector.load %arg2[%c656, %c0_12] : memref<680x128xf32, #tpu.memory_space<vmem>>, vector<1x128xf32>
    %cst_13 = arith.constant dense<0.000000e+00> : vector<8x128xf32>
    %27 = tpu.matmul %24, %25, %cst_13 {dimension_numbers = #tpu.dot_dimension_numbers<[1], [0], [0], [1], [0, 0, 1, 1], [], []>} : vector<8x128xf32>, vector<128x128xf32>, vector<8x128xf32> -> vector<8x128xf32>
    %28 = vector.broadcast %26 : vector<1x128xf32> to vector<8x128xf32>
    %29 = arith.addf %27, %28 : vector<8x128xf32>
    %cst_14 = arith.constant 0.000000e+00 : f32
    %30 = vector.broadcast %cst_14 : f32 to vector<8x128xf32>
    %31 = arith.subf %30, %29 : vector<8x128xf32>
    %32 = math.exp %31 : vector<8x128xf32>
    %cst_15 = arith.constant 1.000000e+00 : f32
    %33 = vector.broadcast %cst_15 : f32 to vector<8x128xf32>
    %34 = arith.addf %33, %32 : vector<8x128xf32>
    %35 = tpu.reciprocal %34 {approx = true} : vector<8x128xf32> -> vector<8x128xf32>
    %36 = arith.mulf %29, %35 : vector<8x128xf32>
    %c384 = arith.constant 384 : index
    %c0_16 = arith.constant 0 : index
    %37 = vector.load %arg2[%c384, %c0_16] : memref<680x128xf32, #tpu.memory_space<vmem>>, vector<128x128xf32>
    %c664 = arith.constant 664 : index
    %c0_17 = arith.constant 0 : index
    %38 = vector.load %arg2[%c664, %c0_17] : memref<680x128xf32, #tpu.memory_space<vmem>>, vector<1x128xf32>
    %cst_18 = arith.constant dense<0.000000e+00> : vector<8x128xf32>
    %39 = tpu.matmul %36, %37, %cst_18 {dimension_numbers = #tpu.dot_dimension_numbers<[1], [0], [0], [1], [0, 0, 1, 1], [], []>} : vector<8x128xf32>, vector<128x128xf32>, vector<8x128xf32> -> vector<8x128xf32>
    %40 = vector.broadcast %38 : vector<1x128xf32> to vector<8x128xf32>
    %41 = arith.addf %39, %40 : vector<8x128xf32>
    %cst_19 = arith.constant 0.000000e+00 : f32
    %42 = vector.broadcast %cst_19 : f32 to vector<8x128xf32>
    %43 = arith.subf %42, %41 : vector<8x128xf32>
    %44 = math.exp %43 : vector<8x128xf32>
    %cst_20 = arith.constant 1.000000e+00 : f32
    %45 = vector.broadcast %cst_20 : f32 to vector<8x128xf32>
    %46 = arith.addf %45, %44 : vector<8x128xf32>
    %47 = tpu.reciprocal %46 {approx = true} : vector<8x128xf32> -> vector<8x128xf32>
    %48 = arith.mulf %41, %47 : vector<8x128xf32>
    %c512 = arith.constant 512 : index
    %c0_21 = arith.constant 0 : index
    %49 = vector.load %arg2[%c512, %c0_21] : memref<680x128xf32, #tpu.memory_space<vmem>>, vector<128x128xf32>
    %c672 = arith.constant 672 : index
    %c0_22 = arith.constant 0 : index
    %50 = vector.load %arg2[%c672, %c0_22] : memref<680x128xf32, #tpu.memory_space<vmem>>, vector<1x128xf32>
    %cst_23 = arith.constant dense<0.000000e+00> : vector<8x128xf32>
    %51 = tpu.matmul %48, %49, %cst_23 {dimension_numbers = #tpu.dot_dimension_numbers<[1], [0], [0], [1], [0, 0, 1, 1], [], []>} : vector<8x128xf32>, vector<128x128xf32>, vector<8x128xf32> -> vector<8x128xf32>
    %52 = vector.broadcast %50 : vector<1x128xf32> to vector<8x128xf32>
    %53 = arith.addf %51, %52 : vector<8x128xf32>
    %cst_24 = arith.constant 0.000000e+00 : f32
    %54 = vector.broadcast %cst_24 : f32 to vector<8x128xf32>
    %55 = arith.subf %54, %53 : vector<8x128xf32>
    %56 = math.exp %55 : vector<8x128xf32>
    %cst_25 = arith.constant 1.000000e+00 : f32
    %57 = vector.broadcast %cst_25 : f32 to vector<8x128xf32>
    %58 = arith.addf %57, %56 : vector<8x128xf32>
    %59 = tpu.reciprocal %58 {approx = true} : vector<8x128xf32> -> vector<8x128xf32>
    %c0_26 = arith.constant 0 : index
    %c0_27 = arith.constant 0 : index
    %60 = vector.load %arg3[%c0_26, %c0_27] : memref<8x128xf32, #tpu.memory_space<vmem>>, vector<8x128xf32>
    tpu.vector_store %arg3[%c0_26, %c0_27], %59 {strides = array<i32>} : memref<8x128xf32, #tpu.memory_space<vmem>>, vector<8x128xf32>,
    return
  }
  func.func @transform_0(%arg0: i32) -> (i32, i32) {
    %c0_i32 = arith.constant 0 : i32
    %c0_i32_0 = arith.constant 0 : i32
    return %arg0, %c0_i32 : i32, i32
  }
  func.func @transform_1(%arg0: i32) -> (i32, i32) {
    %c0_i32 = arith.constant 0 : i32
    %c0_i32_0 = arith.constant 0 : i32
    %c0_i32_1 = arith.constant 0 : i32
    return %c0_i32, %c0_i32_0 : i32, i32
  }
  func.func @transform_2(%arg0: i32) -> (i32, i32) {
    %c0_i32 = arith.constant 0 : i32
    %c0_i32_0 = arith.constant 0 : i32
    return %arg0, %c0_i32 : i32, i32
  }
}

</mosaic_0001>

<llo_original>
// kernel: tpu_custom_call.1
$region0: #{tpu_custom_call.1}
  #allocation0 [shape = 'u32[]', space=smem, size = 0x4, offset = 0x4, fixed_abs, tag = 'smem constant byte address 0x4 - core index']
  #allocation1 [shape = 'u32[144,128]{1,0:T(1,128)}', space=vmem, size = 0x12000, scoped, tag = 'internal scratch']
  %s0 = inlined_call_operand.hbm [shape: f32[8,128], index: 0, kind: input, shape index: {}]
  %s1 = inlined_call_operand.hbm [shape: f32[680,128], index: 1, kind: input, shape index: {}]
  %s2 = inlined_call_operand.hbm [shape: f32[8,128], index: 2, kind: output, shape index: {}]
  %s3 = sld [smem:[#allocation0]]
  $region26: #{tpu_custom_call.1} parent=0
    _
  %s5 = ssub.s32 1, %s3
  %s6 = scalar_select 0, %s5, %s3
  $region1: #{tpu_custom_call.1} parent=0
    #allocation2 [shape = 'u8[4096]{0}', space=vmem, size = 0x1000, scoped, tag = 'input window, operand 0, single buffered']
    #allocation3 [shape = 's32[1]{0}', space=sflag, size = 0x4, scoped, tag = 'scoped memory for tpu_custom_call.1']
    #allocation4 [shape = 's32[1]{0}', space=sflag, size = 0x4, scoped, tag = 'scoped memory for tpu_custom_call.1']
    #allocation5 [shape = 'u8[348160]{0}', space=vmem, size = 0x55000, scoped, tag = 'input window, operand 1, single buffered']
    #allocation6 [shape = 's32[1]{0}', space=sflag, size = 0x4, scoped, tag = 'scoped memory for tpu_custom_call.1']
    #allocation7 [shape = 'u8[4096]{0}', space=vmem, size = 0x1000, scoped, tag = 'output window, operand 0, single buffered']
    %7 = vsyncpa [#allocation3], 0
    %8 = vsyncpa [#allocation6], 0
    %9 = vsyncpa [#allocation4], 0
    // Predicated region
    $region2: #{tpu_custom_call.1} parent=1 // pred_check
      _
    $region3: #{tpu_custom_call.1} parent=1 // pred_check_branch
      %11 = sbr.rel (0) target = $region5
    $region4: #{tpu_custom_call.1} parent=1 // pred_region
      %s13 = ssub.s32 128, 128
      %14 = vsyncadd [#allocation3], %s13
      %s16 = sshll.u32 [#allocation2], 4
      %s17 = int_to_ptr.vmem [resolvable:$true] %s16
      %19 = dma.hbm_to_vmem [thread:$0]  %s0, 128, %s17, [#allocation3]
    $region5: #{tpu_custom_call.1} parent=1 // pred_fallthru
      _
    // Predicated region
    $region6: #{tpu_custom_call.1} parent=1 // pred_check
      _
    $region7: #{tpu_custom_call.1} parent=1 // pred_check_branch
      %21 = sbr.rel (0) target = $region9
    $region8: #{tpu_custom_call.1} parent=1 // pred_region
      %s23 = ssub.s32 10880, 10880
      %24 = vsyncadd [#allocation6], %s23
      %s25 = sshll.u32 [#allocation5], 4
      %s26 = int_to_ptr.vmem [resolvable:$true] %s25
      %31 = dma.hbm_to_vmem [thread:$0]  %s1, 10880, %s26, [#allocation6], 128, 128, 8
    $region9: #{tpu_custom_call.1} parent=1 // pred_fallthru
      _
    // Predicated region
    $region10: #{tpu_custom_call.1} parent=1 // pred_check
      _
    $region11: #{tpu_custom_call.1} parent=1 // pred_check_branch
      %33 = sbr.rel (0) target = $region13
    $region12: #{tpu_custom_call.1} parent=1 // pred_region
      %34 = dma.done [#allocation3], 128
    $region13: #{tpu_custom_call.1} parent=1 // pred_fallthru
      _
    // Predicated region
    $region14: #{tpu_custom_call.1} parent=1 // pred_check
      _
    $region15: #{tpu_custom_call.1} parent=1 // pred_check_branch
      %36 = sbr.rel (0) target = $region17
    $region16: #{tpu_custom_call.1} parent=1 // pred_region
      %37 = dma.done [#allocation6], 10880
    $region17: #{tpu_custom_call.1} parent=1 // pred_fallthru
      _
    %v38 = vld [vmem:[#allocation2] sm:$0xff]
    %v39 = vld [vmem:[#allocation5] sm:$0xff]
    %v40 = vld [vmem:[#allocation5 + $0x8] sm:$0xff]
    %v41 = vld [vmem:[#allocation5 + $0x10] sm:$0xff]
    %v42 = vld [vmem:[#allocation5 + $0x18] sm:$0xff]
    %v43 = vld [vmem:[#allocation5 + $0x20] sm:$0xff]
    %v44 = vld [vmem:[#allocation5 + $0x28] sm:$0xff]
    %v45 = vld [vmem:[#allocation5 + $0x30] sm:$0xff]
    %v46 = vld [vmem:[#allocation5 + $0x38] sm:$0xff]
    %v47 = vld [vmem:[#allocation5 + $0x40] sm:$0xff]
    %v48 = vld [vmem:[#allocation5 + $0x48] sm:$0xff]
    %v49 = vld [vmem:[#allocation5 + $0x50] sm:$0xff]
    %v50 = vld [vmem:[#allocation5 + $0x58] sm:$0xff]
    %v51 = vld [vmem:[#allocation5 + $0x60] sm:$0xff]
    %v52 = vld [vmem:[#allocation5 + $0x68] sm:$0xff]
    %v53 = vld [vmem:[#allocation5 + $0x70] sm:$0xff]
    %v54 = vld [vmem:[#allocation5 + $0x78] sm:$0xff]
    %v55 = vld [vmem:[#allocation5 + $0x280] sm:$0x1]
    %v56 = vlaneseq
    %v57 = vshrl.u32 %v56, 7
    %v58 = vsub.s32 0, %v57
    %v59 = vrot.slane %v55, %v58
    %60 = vmatprep.subr.mxu0 0.0
    %61 = vmatpush1.msra.mxu0 %v39
    %62 = vmatprep.subr.mxu0 0.0
    %63 = vmatpush1.msra.mxu0 %v40
    %64 = vmatprep.subr.mxu0 0.0
    %65 = vmatpush1.msra.mxu0 %v41
    %66 = vmatprep.subr.mxu0 0.0
    %67 = vmatpush1.msra.mxu0 %v42
    %68 = vmatprep.subr.mxu0 0.0
    %69 = vmatpush1.msra.mxu0 %v43
    %70 = vmatprep.subr.mxu0 0.0
    %71 = vmatpush1.msra.mxu0 %v44
    %72 = vmatprep.subr.mxu0 0.0
    %73 = vmatpush1.msra.mxu0 %v45
    %74 = vmatprep.subr.mxu0 0.0
    %75 = vmatpush1.msra.mxu0 %v46
    %76 = vmatprep.subr.mxu0 0.0
    %77 = vmatpush1.msra.mxu0 %v47
    %78 = vmatprep.subr.mxu0 0.0
    %79 = vmatpush1.msra.mxu0 %v48
    %80 = vmatprep.subr.mxu0 0.0
    %81 = vmatpush1.msra.mxu0 %v49
    %82 = vmatprep.subr.mxu0 0.0
    %83 = vmatpush1.msra.mxu0 %v50
    %84 = vmatprep.subr.mxu0 0.0
    %85 = vmatpush1.msra.mxu0 %v51
    %86 = vmatprep.subr.mxu0 0.0
    %87 = vmatpush1.msra.mxu0 %v52
    %88 = vmatprep.subr.mxu0 0.0
    %89 = vmatpush1.msra.mxu0 %v53
    %90 = vmatprep.subr.mxu0 0.0
    %91 = vmatpush1.msra.mxu0 %v54
    %92 = vmatprep.subr.mxu0 0.0
    %93 = vmatpush1.msra.mxu0 0.0
    %94 = vmatprep.subr.mxu0 0.0
    %95 = vmatpush1.msra.mxu0 0.0
    %96 = vmatprep.subr.mxu0 0.0
    %97 = vmatpush1.msra.mxu0 0.0
    %98 = vmatprep.subr.mxu0 0.0
    %99 = vmatpush1.msra.mxu0 0.0
    %100 = vmatprep.subr.mxu0 0.0
    %101 = vmatpush1.msra.mxu0 0.0
    %102 = vmatprep.subr.mxu0 0.0
    %103 = vmatpush1.msra.mxu0 0.0
    %104 = vmatprep.subr.mxu0 0.0
    %105 = vmatpush1.msra.mxu0 0.0
    %106 = vmatprep.subr.mxu0 0.0
    %107 = vmatpush1.msra.mxu0 0.0
    %108 = vmatprep.subr.mxu0 0.0
    %109 = vmatpush1.msra.mxu0 0.0
    %110 = vmatprep.subr.mxu0 0.0
    %111 = vmatpush1.msra.mxu0 0.0
    %112 = vmatprep.subr.mxu0 0.0
    %113 = vmatpush1.msra.mxu0 0.0
    %114 = vmatprep.subr.mxu0 0.0
    %115 = vmatpush1.msra.mxu0 0.0
    %116 = vmatprep.subr.mxu0 0.0
    %117 = vmatpush1.msra.mxu0 0.0
    %118 = vmatprep.subr.mxu0 0.0
    %119 = vmatpush1.msra.mxu0 0.0
    %120 = vmatprep.subr.mxu0 0.0
    %121 = vmatpush1.msra.mxu0 0.0
    %122 = vmatprep.subr.mxu0 0.0
    %123 = vmatpush1.msra.mxu0 0.0
    %124 = vmatprep.mubr.f32.mxu0 0.0
    %125 = vmatmul.mubr.f32.gmra.mrb[0].mxu0 %v38
    %v126 = vpop.f32.mrb[0].mxu0
    %v127 = vadd.f32 %v59, %v126
    %v128 = vpop.f32.mrb[0].mxu0
    %129 = vdwg.mxu0
    %v130 = vsub.f32 0.0, %v127
    %v131 = vmul.f32 %v130, 1.442695
    %v132 = vpow.pop %v131
    %v133 = vadd.f32 %v132, 1.0
    %v134 = vrcp.pop %v133
    %v135 = vmul.f32 %v127, %v134
    %v136 = vld [vmem:[#allocation5 + $0x80] sm:$0xff]
    %v137 = vld [vmem:[#allocation5 + $0x88] sm:$0xff]
    %v138 = vld [vmem:[#allocation5 + $0x90] sm:$0xff]
    %v139 = vld [vmem:[#allocation5 + $0x98] sm:$0xff]
    %v140 = vld [vmem:[#allocation5 + $0xa0] sm:$0xff]
    %v141 = vld [vmem:[#allocation5 + $0xa8] sm:$0xff]
    %v142 = vld [vmem:[#allocation5 + $0xb0] sm:$0xff]
    %v143 = vld [vmem:[#allocation5 + $0xb8] sm:$0xff]
    %v144 = vld [vmem:[#allocation5 + $0xc0] sm:$0xff]
    %v145 = vld [vmem:[#allocation5 + $0xc8] sm:$0xff]
    %v146 = vld [vmem:[#allocation5 + $0xd0] sm:$0xff]
    %v147 = vld [vmem:[#allocation5 + $0xd8] sm:$0xff]
    %v148 = vld [vmem:[#allocation5 + $0xe0] sm:$0xff]
    %v149 = vld [vmem:[#allocation5 + $0xe8] sm:$0xff]
    %v150 = vld [vmem:[#allocation5 + $0xf0] sm:$0xff]
    %v151 = vld [vmem:[#allocation5 + $0xf8] sm:$0xff]
    %v152 = vld [vmem:[#allocation5 + $0x288] sm:$0x1]
    %v153 = vlaneseq
    %v154 = vshrl.u32 %v153, 7
    %v155 = vsub.s32 0, %v154
    %v156 = vrot.slane %v152, %v155
    %157 = vmatprep.subr.mxu0 0.0
    %158 = vmatpush1.msra.mxu0 %v136
    %159 = vmatprep.subr.mxu0 0.0
    %160 = vmatpush1.msra.mxu0 %v137
    %161 = vmatprep.subr.mxu0 0.0
    %162 = vmatpush1.msra.mxu0 %v138
    %163 = vmatprep.subr.mxu0 0.0
    %164 = vmatpush1.msra.mxu0 %v139
    %165 = vmatprep.subr.mxu0 0.0
    %166 = vmatpush1.msra.mxu0 %v140
    %167 = vmatprep.subr.mxu0 0.0
    %168 = vmatpush1.msra.mxu0 %v141
    %169 = vmatprep.subr.mxu0 0.0
    %170 = vmatpush1.msra.mxu0 %v142
    %171 = vmatprep.subr.mxu0 0.0
    %172 = vmatpush1.msra.mxu0 %v143
    %173 = vmatprep.subr.mxu0 0.0
    %174 = vmatpush1.msra.mxu0 %v144
    %175 = vmatprep.subr.mxu0 0.0
    %176 = vmatpush1.msra.mxu0 %v145
    %177 = vmatprep.subr.mxu0 0.0
    %178 = vmatpush1.msra.mxu0 %v146
    %179 = vmatprep.subr.mxu0 0.0
    %180 = vmatpush1.msra.mxu0 %v147
    %181 = vmatprep.subr.mxu0 0.0
    %182 = vmatpush1.msra.mxu0 %v148
    %183 = vmatprep.subr.mxu0 0.0
    %184 = vmatpush1.msra.mxu0 %v149
    %185 = vmatprep.subr.mxu0 0.0
    %186 = vmatpush1.msra.mxu0 %v150
    %187 = vmatprep.subr.mxu0 0.0
    %188 = vmatpush1.msra.mxu0 %v151
    %189 = vmatprep.subr.mxu0 0.0
    %190 = vmatpush1.msra.mxu0 0.0
    %191 = vmatprep.subr.mxu0 0.0
    %192 = vmatpush1.msra.mxu0 0.0
    %193 = vmatprep.subr.mxu0 0.0
    %194 = vmatpush1.msra.mxu0 0.0
    %195 = vmatprep.subr.mxu0 0.0
    %196 = vmatpush1.msra.mxu0 0.0
    %197 = vmatprep.subr.mxu0 0.0
    %198 = vmatpush1.msra.mxu0 0.0
    %199 = vmatprep.subr.mxu0 0.0
    %200 = vmatpush1.msra.mxu0 0.0
    %201 = vmatprep.subr.mxu0 0.0
    %202 = vmatpush1.msra.mxu0 0.0
    %203 = vmatprep.subr.mxu0 0.0
    %204 = vmatpush1.msra.mxu0 0.0
    %205 = vmatprep.subr.mxu0 0.0
    %206 = vmatpush1.msra.mxu0 0.0
    %207 = vmatprep.subr.mxu0 0.0
    %208 = vmatpush1.msra.mxu0 0.0
    %209 = vmatprep.subr.mxu0 0.0
    %210 = vmatpush1.msra.mxu0 0.0
    %211 = vmatprep.subr.mxu0 0.0
    %212 = vmatpush1.msra.mxu0 0.0
    %213 = vmatprep.subr.mxu0 0.0
    %214 = vmatpush1.msra.mxu0 0.0
    %215 = vmatprep.subr.mxu0 0.0
    %216 = vmatpush1.msra.mxu0 0.0
    %217 = vmatprep.subr.mxu0 0.0
    %218 = vmatpush1.msra.mxu0 0.0
    %219 = vmatprep.subr.mxu0 0.0
    %220 = vmatpush1.msra.mxu0 0.0
    %221 = vmatprep.mubr.f32.mxu0 0.0
    %222 = vmatmul.mubr.f32.gmra.mrb[0].mxu0 %v135
    %v223 = vpop.f32.mrb[0].mxu0
    %v224 = vadd.f32 %v156, %v223
    %v225 = vpop.f32.mrb[0].mxu0
    %226 = vdwg.mxu0
    %v227 = vsub.f32 0.0, %v224
    %v228 = vmul.f32 %v227, 1.442695
    %v229 = vpow.pop %v228
    %v230 = vadd.f32 %v229, 1.0
    %v231 = vrcp.pop %v230
    %v232 = vmul.f32 %v224, %v231
    %v233 = vld [vmem:[#allocation5 + $0x100] sm:$0xff]
    %v234 = vld [vmem:[#allocation5 + $0x108] sm:$0xff]
    %v235 = vld [vmem:[#allocation5 + $0x110] sm:$0xff]
    %v236 = vld [vmem:[#allocation5 + $0x118] sm:$0xff]
    %v237 = vld [vmem:[#allocation5 + $0x120] sm:$0xff]
    %v238 = vld [vmem:[#allocation5 + $0x128] sm:$0xff]
    %v239 = vld [vmem:[#allocation5 + $0x130] sm:$0xff]
    %v240 = vld [vmem:[#allocation5 + $0x138] sm:$0xff]
    %v241 = vld [vmem:[#allocation5 + $0x140] sm:$0xff]
    %v242 = vld [vmem:[#allocation5 + $0x148] sm:$0xff]
    %v243 = vld [vmem:[#allocation5 + $0x150] sm:$0xff]
    %v244 = vld [vmem:[#allocation5 + $0x158] sm:$0xff]
    %v245 = vld [vmem:[#allocation5 + $0x160] sm:$0xff]
    %v246 = vld [vmem:[#allocation5 + $0x168] sm:$0xff]
    %v247 = vld [vmem:[#allocation5 + $0x170] sm:$0xff]
    %v248 = vld [vmem:[#allocation5 + $0x178] sm:$0xff]
    %v249 = vld [vmem:[#allocation5 + $0x290] sm:$0x1]
    %v250 = vlaneseq
    %v251 = vshrl.u32 %v250, 7
    %v252 = vsub.s32 0, %v251
    %v253 = vrot.slane %v249, %v252
    %254 = vmatprep.subr.mxu0 0.0
    %255 = vmatpush1.msra.mxu0 %v233
    %256 = vmatprep.subr.mxu0 0.0
    %257 = vmatpush1.msra.mxu0 %v234
    %258 = vmatprep.subr.mxu0 0.0
    %259 = vmatpush1.msra.mxu0 %v235
    %260 = vmatprep.subr.mxu0 0.0
    %261 = vmatpush1.msra.mxu0 %v236
    %262 = vmatprep.subr.mxu0 0.0
    %263 = vmatpush1.msra.mxu0 %v237
    %264 = vmatprep.subr.mxu0 0.0
    %265 = vmatpush1.msra.mxu0 %v238
    %266 = vmatprep.subr.mxu0 0.0
    %267 = vmatpush1.msra.mxu0 %v239
    %268 = vmatprep.subr.mxu0 0.0
    %269 = vmatpush1.msra.mxu0 %v240
    %270 = vmatprep.subr.mxu0 0.0
    %271 = vmatpush1.msra.mxu0 %v241
    %272 = vmatprep.subr.mxu0 0.0
    %273 = vmatpush1.msra.mxu0 %v242
    %274 = vmatprep.subr.mxu0 0.0
    %275 = vmatpush1.msra.mxu0 %v243
    %276 = vmatprep.subr.mxu0 0.0
    %277 = vmatpush1.msra.mxu0 %v244
    %278 = vmatprep.subr.mxu0 0.0
    %279 = vmatpush1.msra.mxu0 %v245
    %280 = vmatprep.subr.mxu0 0.0
    %281 = vmatpush1.msra.mxu0 %v246
    %282 = vmatprep.subr.mxu0 0.0
    %283 = vmatpush1.msra.mxu0 %v247
    %284 = vmatprep.subr.mxu0 0.0
    %285 = vmatpush1.msra.mxu0 %v248
    %286 = vmatprep.subr.mxu0 0.0
    %287 = vmatpush1.msra.mxu0 0.0
    %288 = vmatprep.subr.mxu0 0.0
    %289 = vmatpush1.msra.mxu0 0.0
    %290 = vmatprep.subr.mxu0 0.0
    %291 = vmatpush1.msra.mxu0 0.0
    %292 = vmatprep.subr.mxu0 0.0
    %293 = vmatpush1.msra.mxu0 0.0
    %294 = vmatprep.subr.mxu0 0.0
    %295 = vmatpush1.msra.mxu0 0.0
    %296 = vmatprep.subr.mxu0 0.0
    %297 = vmatpush1.msra.mxu0 0.0
    %298 = vmatprep.subr.mxu0 0.0
    %299 = vmatpush1.msra.mxu0 0.0
    %300 = vmatprep.subr.mxu0 0.0
    %301 = vmatpush1.msra.mxu0 0.0
    %302 = vmatprep.subr.mxu0 0.0
    %303 = vmatpush1.msra.mxu0 0.0
    %304 = vmatprep.subr.mxu0 0.0
    %305 = vmatpush1.msra.mxu0 0.0
    %306 = vmatprep.subr.mxu0 0.0
    %307 = vmatpush1.msra.mxu0 0.0
    %308 = vmatprep.subr.mxu0 0.0
    %309 = vmatpush1.msra.mxu0 0.0
    %310 = vmatprep.subr.mxu0 0.0
    %311 = vmatpush1.msra.mxu0 0.0
    %312 = vmatprep.subr.mxu0 0.0
    %313 = vmatpush1.msra.mxu0 0.0
    %314 = vmatprep.subr.mxu0 0.0
    %315 = vmatpush1.msra.mxu0 0.0
    %316 = vmatprep.subr.mxu0 0.0
    %317 = vmatpush1.msra.mxu0 0.0
    %318 = vmatprep.mubr.f32.mxu0 0.0
    %319 = vmatmul.mubr.f32.gmra.mrb[0].mxu0 %v232
    %v320 = vpop.f32.mrb[0].mxu0
    %v321 = vadd.f32 %v253, %v320
    %v322 = vpop.f32.mrb[0].mxu0
    %323 = vdwg.mxu0
    %v324 = vsub.f32 0.0, %v321
    %v325 = vmul.f32 %v324, 1.442695
    %v326 = vpow.pop %v325
    %v327 = vadd.f32 %v326, 1.0
    %v328 = vrcp.pop %v327
    %v329 = vmul.f32 %v321, %v328
    %v330 = vld [vmem:[#allocation5 + $0x180] sm:$0xff]
    %v331 = vld [vmem:[#allocation5 + $0x188] sm:$0xff]
    %v332 = vld [vmem:[#allocation5 + $0x190] sm:$0xff]
    %v333 = vld [vmem:[#allocation5 + $0x198] sm:$0xff]
    %v334 = vld [vmem:[#allocation5 + $0x1a0] sm:$0xff]
    %v335 = vld [vmem:[#allocation5 + $0x1a8] sm:$0xff]
    %v336 = vld [vmem:[#allocation5 + $0x1b0] sm:$0xff]
    %v337 = vld [vmem:[#allocation5 + $0x1b8] sm:$0xff]
    %v338 = vld [vmem:[#allocation5 + $0x1c0] sm:$0xff]
    %v339 = vld [vmem:[#allocation5 + $0x1c8] sm:$0xff]
    %v340 = vld [vmem:[#allocation5 + $0x1d0] sm:$0xff]
    %v341 = vld [vmem:[#allocation5 + $0x1d8] sm:$0xff]
    %v342 = vld [vmem:[#allocation5 + $0x1e0] sm:$0xff]
    %v343 = vld [vmem:[#allocation5 + $0x1e8] sm:$0xff]
    %v344 = vld [vmem:[#allocation5 + $0x1f0] sm:$0xff]
    %v345 = vld [vmem:[#allocation5 + $0x1f8] sm:$0xff]
    %v346 = vld [vmem:[#allocation5 + $0x298] sm:$0x1]
    %v347 = vlaneseq
    %v348 = vshrl.u32 %v347, 7
    %v349 = vsub.s32 0, %v348
    %v350 = vrot.slane %v346, %v349
    %351 = vmatprep.subr.mxu0 0.0
    %352 = vmatpush1.msra.mxu0 %v330
    %353 = vmatprep.subr.mxu0 0.0
    %354 = vmatpush1.msra.mxu0 %v331
    %355 = vmatprep.subr.mxu0 0.0
    %356 = vmatpush1.msra.mxu0 %v332
    %357 = vmatprep.subr.mxu0 0.0
    %358 = vmatpush1.msra.mxu0 %v333
    %359 = vmatprep.subr.mxu0 0.0
    %360 = vmatpush1.msra.mxu0 %v334
    %361 = vmatprep.subr.mxu0 0.0
    %362 = vmatpush1.msra.mxu0 %v335
    %363 = vmatprep.subr.mxu0 0.0
    %364 = vmatpush1.msra.mxu0 %v336
    %365 = vmatprep.subr.mxu0 0.0
    %366 = vmatpush1.msra.mxu0 %v337
    %367 = vmatprep.subr.mxu0 0.0
    %368 = vmatpush1.msra.mxu0 %v338
    %369 = vmatprep.subr.mxu0 0.0
    %370 = vmatpush1.msra.mxu0 %v339
    %371 = vmatprep.subr.mxu0 0.0
    %372 = vmatpush1.msra.mxu0 %v340
    %373 = vmatprep.subr.mxu0 0.0
    %374 = vmatpush1.msra.mxu0 %v341
    %375 = vmatprep.subr.mxu0 0.0
    %376 = vmatpush1.msra.mxu0 %v342
    %377 = vmatprep.subr.mxu0 0.0
    %378 = vmatpush1.msra.mxu0 %v343
    %379 = vmatprep.subr.mxu0 0.0
    %380 = vmatpush1.msra.mxu0 %v344
    %381 = vmatprep.subr.mxu0 0.0
    %382 = vmatpush1.msra.mxu0 %v345
    %383 = vmatprep.subr.mxu0 0.0
    %384 = vmatpush1.msra.mxu0 0.0
    %385 = vmatprep.subr.mxu0 0.0
    %386 = vmatpush1.msra.mxu0 0.0
    %387 = vmatprep.subr.mxu0 0.0
    %388 = vmatpush1.msra.mxu0 0.0
    %389 = vmatprep.subr.mxu0 0.0
    %390 = vmatpush1.msra.mxu0 0.0
    %391 = vmatprep.subr.mxu0 0.0
    %392 = vmatpush1.msra.mxu0 0.0
    %393 = vmatprep.subr.mxu0 0.0
    %394 = vmatpush1.msra.mxu0 0.0
    %395 = vmatprep.subr.mxu0 0.0
    %396 = vmatpush1.msra.mxu0 0.0
    %397 = vmatprep.subr.mxu0 0.0
    %398 = vmatpush1.msra.mxu0 0.0
    %399 = vmatprep.subr.mxu0 0.0
    %400 = vmatpush1.msra.mxu0 0.0
    %401 = vmatprep.subr.mxu0 0.0
    %402 = vmatpush1.msra.mxu0 0.0
    %403 = vmatprep.subr.mxu0 0.0
    %404 = vmatpush1.msra.mxu0 0.0
    %405 = vmatprep.subr.mxu0 0.0
    %406 = vmatpush1.msra.mxu0 0.0
    %407 = vmatprep.subr.mxu0 0.0
    %408 = vmatpush1.msra.mxu0 0.0
    %409 = vmatprep.subr.mxu0 0.0
    %410 = vmatpush1.msra.mxu0 0.0
    %411 = vmatprep.subr.mxu0 0.0
    %412 = vmatpush1.msra.mxu0 0.0
    %413 = vmatprep.subr.mxu0 0.0
    %414 = vmatpush1.msra.mxu0 0.0
    %415 = vmatprep.mubr.f32.mxu0 0.0
    %416 = vmatmul.mubr.f32.gmra.mrb[0].mxu0 %v329
    %v417 = vpop.f32.mrb[0].mxu0
    %v418 = vadd.f32 %v350, %v417
    %v419 = vpop.f32.mrb[0].mxu0
    %420 = vdwg.mxu0
    %v421 = vsub.f32 0.0, %v418
    %v422 = vmul.f32 %v421, 1.442695
    %v423 = vpow.pop %v422
    %v424 = vadd.f32 %v423, 1.0
    %v425 = vrcp.pop %v424
    %v426 = vmul.f32 %v418, %v425
    %v427 = vld [vmem:[#allocation5 + $0x200] sm:$0xff]
    %v428 = vld [vmem:[#allocation5 + $0x208] sm:$0xff]
    %v429 = vld [vmem:[#allocation5 + $0x210] sm:$0xff]
    %v430 = vld [vmem:[#allocation5 + $0x218] sm:$0xff]
    %v431 = vld [vmem:[#allocation5 + $0x220] sm:$0xff]
    %v432 = vld [vmem:[#allocation5 + $0x228] sm:$0xff]
    %v433 = vld [vmem:[#allocation5 + $0x230] sm:$0xff]
    %v434 = vld [vmem:[#allocation5 + $0x238] sm:$0xff]
    %v435 = vld [vmem:[#allocation5 + $0x240] sm:$0xff]
    %v436 = vld [vmem:[#allocation5 + $0x248] sm:$0xff]
    %v437 = vld [vmem:[#allocation5 + $0x250] sm:$0xff]
    %v438 = vld [vmem:[#allocation5 + $0x258] sm:$0xff]
    %v439 = vld [vmem:[#allocation5 + $0x260] sm:$0xff]
    %v440 = vld [vmem:[#allocation5 + $0x268] sm:$0xff]
    %v441 = vld [vmem:[#allocation5 + $0x270] sm:$0xff]
    %v442 = vld [vmem:[#allocation5 + $0x278] sm:$0xff]
    %v443 = vld [vmem:[#allocation5 + $0x2a0] sm:$0x1]
    %v444 = vlaneseq
    %v445 = vshrl.u32 %v444, 7
    %v446 = vsub.s32 0, %v445
    %v447 = vrot.slane %v443, %v446
    %448 = vmatprep.subr.mxu0 0.0
    %449 = vmatpush1.msra.mxu0 %v427
    %450 = vmatprep.subr.mxu0 0.0
    %451 = vmatpush1.msra.mxu0 %v428
    %452 = vmatprep.subr.mxu0 0.0
    %453 = vmatpush1.msra.mxu0 %v429
    %454 = vmatprep.subr.mxu0 0.0
    %455 = vmatpush1.msra.mxu0 %v430
    %456 = vmatprep.subr.mxu0 0.0
    %457 = vmatpush1.msra.mxu0 %v431
    %458 = vmatprep.subr.mxu0 0.0
    %459 = vmatpush1.msra.mxu0 %v432
    %460 = vmatprep.subr.mxu0 0.0
    %461 = vmatpush1.msra.mxu0 %v433
    %462 = vmatprep.subr.mxu0 0.0
    %463 = vmatpush1.msra.mxu0 %v434
    %464 = vmatprep.subr.mxu0 0.0
    %465 = vmatpush1.msra.mxu0 %v435
    %466 = vmatprep.subr.mxu0 0.0
    %467 = vmatpush1.msra.mxu0 %v436
    %468 = vmatprep.subr.mxu0 0.0
    %469 = vmatpush1.msra.mxu0 %v437
    %470 = vmatprep.subr.mxu0 0.0
    %471 = vmatpush1.msra.mxu0 %v438
    %472 = vmatprep.subr.mxu0 0.0
    %473 = vmatpush1.msra.mxu0 %v439
    %474 = vmatprep.subr.mxu0 0.0
    %475 = vmatpush1.msra.mxu0 %v440
    %476 = vmatprep.subr.mxu0 0.0
    %477 = vmatpush1.msra.mxu0 %v441
    %478 = vmatprep.subr.mxu0 0.0
    %479 = vmatpush1.msra.mxu0 %v442
    %480 = vmatprep.subr.mxu0 0.0
    %481 = vmatpush1.msra.mxu0 0.0
    %482 = vmatprep.subr.mxu0 0.0
    %483 = vmatpush1.msra.mxu0 0.0
    %484 = vmatprep.subr.mxu0 0.0
    %485 = vmatpush1.msra.mxu0 0.0
    %486 = vmatprep.subr.mxu0 0.0
    %487 = vmatpush1.msra.mxu0 0.0
    %488 = vmatprep.subr.mxu0 0.0
    %489 = vmatpush1.msra.mxu0 0.0
    %490 = vmatprep.subr.mxu0 0.0
    %491 = vmatpush1.msra.mxu0 0.0
    %492 = vmatprep.subr.mxu0 0.0
    %493 = vmatpush1.msra.mxu0 0.0
    %494 = vmatprep.subr.mxu0 0.0
    %495 = vmatpush1.msra.mxu0 0.0
    %496 = vmatprep.subr.mxu0 0.0
    %497 = vmatpush1.msra.mxu0 0.0
    %498 = vmatprep.subr.mxu0 0.0
    %499 = vmatpush1.msra.mxu0 0.0
    %500 = vmatprep.subr.mxu0 0.0
    %501 = vmatpush1.msra.mxu0 0.0
    %502 = vmatprep.subr.mxu0 0.0
    %503 = vmatpush1.msra.mxu0 0.0
    %504 = vmatprep.subr.mxu0 0.0
    %505 = vmatpush1.msra.mxu0 0.0
    %506 = vmatprep.subr.mxu0 0.0
    %507 = vmatpush1.msra.mxu0 0.0
    %508 = vmatprep.subr.mxu0 0.0
    %509 = vmatpush1.msra.mxu0 0.0
    %510 = vmatprep.subr.mxu0 0.0
    %511 = vmatpush1.msra.mxu0 0.0
    %512 = vmatprep.mubr.f32.mxu0 0.0
    %513 = vmatmul.mubr.f32.gmra.mrb[0].mxu0 %v426
    %v514 = vpop.f32.mrb[0].mxu0
    %v515 = vadd.f32 %v447, %v514
    %v516 = vpop.f32.mrb[0].mxu0
    %517 = vdwg.mxu0
    %v518 = vsub.f32 0.0, %v515
    %v519 = vmul.f32 %v518, 1.442695
    %v520 = vpow.pop %v519
    %v521 = vadd.f32 %v520, 1.0
    %v522 = vrcp.pop %v521
    %523 = vst [vmem:[#allocation7] sm:$0xff] %v522
    // Predicated region
    $region18: #{tpu_custom_call.1} parent=1 // pred_check
      _
    $region19: #{tpu_custom_call.1} parent=1 // pred_check_branch
      %525 = sbr.rel (0) target = $region21
    $region20: #{tpu_custom_call.1} parent=1 // pred_region
      %s527 = ssub.s32 128, 128
      %528 = vsyncadd [#allocation4], %s527
      %s530 = sshll.u32 [#allocation7], 4
      %s531 = int_to_ptr.vmem [resolvable:$true] %s530
      %533 = dma.vmem_to_hbm [thread:$0]  %s531, 128, %s2, [#allocation4]
    $region21: #{tpu_custom_call.1} parent=1 // pred_fallthru
      _
    // Predicated region
    $region22: #{tpu_custom_call.1} parent=1 // pred_check
      _
    $region23: #{tpu_custom_call.1} parent=1 // pred_check_branch
      %535 = sbr.rel (0) target = $region25
    $region24: #{tpu_custom_call.1} parent=1 // pred_region
      %536 = dma.done [#allocation4], 128
    $region25: #{tpu_custom_call.1} parent=1 // pred_fallthru
      _
    %537 = vsyncpa [#allocation3], 1
    %538 = vsyncpa [#allocation6], 1
    %539 = vsyncpa [#allocation4], 1

</llo_original>
